<compile_context>
chip_gen: v7x
topology: tpu7x:2x2x1
jax: 0.10.0
libtpu: 0.0.40
codegen_flags: <defaults>
</compile_context>

<pallas_src>
import jax
import jax.numpy as jnp
from jax.experimental import pallas as pl
from jax.experimental.pallas import tpu as pltpu


def _round_up(x, m):
    return ((x + m - 1) // m) * m


def aggregate_kernel(va_ref, vb_ref,
                     w1a_ref, w1b_ref, b1_ref,
                     w2_ref, b2_ref, w3_ref, b3_ref,
                     out_ref):
    # va_ref/vb_ref: (TB, S*H) in the streaming dtype; fed straight to the MXU
    # (bf16 x bf16 -> f32 accumulation).  Seq-sum + concat + first Linear are
    # all folded into these two MXU pushes.
    h1 = (jnp.dot(va_ref[...], w1a_ref[...], preferred_element_type=jnp.float32)
          + jnp.dot(vb_ref[...], w1b_ref[...], preferred_element_type=jnp.float32)
          + b1_ref[...])
    h1 = jnp.maximum(h1, 0.0)

    # Second Linear + ReLU (tiny; f32 weights, f32 accumulation).
    h2 = jnp.dot(h1, w2_ref[...], preferred_element_type=jnp.float32) + b2_ref[...]
    h2 = jnp.maximum(h2, 0.0)

    # Final classifier (lane-padded to 128 output columns, zero-padded W3/b3).
    y = jnp.dot(h2, w3_ref[...], preferred_element_type=jnp.float32) + b3_ref[...]
    out_ref[...] = y.astype(out_ref.dtype)


def aggregate_forward(V_A, V_B, params):
    """V_A, V_B: (B, S, H) in f32 or bf16 (streamed as-is, no extra HBM copy).
    params: dict of f32 weights/biases."""
    B, S, H = V_A.shape
    dt = V_A.dtype                                     # streaming dtype
    hidden = params["w2"].shape[0]
    num_outputs = params["w3"].shape[1]
    n_pad = _round_up(max(num_outputs, 128), 128)      # lane-dense output
    out_dt = jnp.float32 if dt == jnp.float32 else jnp.bfloat16

    # ---- weight preprocessing (layout plumbing, tiny, outside the kernel) ----
    w1 = params["w1"]                                  # (2H, hidden)
    # Split the concat and fold the sequence-sum into the matmul by row-tiling;
    # cast to the streaming dtype so the MXU sees matching operands (no in-kernel
    # widen, f32 accumulation via preferred_element_type).
    w1a = jnp.tile(w1[:H], (S, 1)).astype(dt)          # (S*H, hidden)
    w1b = jnp.tile(w1[H:2 * H], (S, 1)).astype(dt)     # (S*H, hidden)
    b1 = params["b1"].reshape(1, hidden).astype(jnp.float32)
    w2 = params["w2"].astype(jnp.float32)
    b2 = params["b2"].reshape(1, hidden).astype(jnp.float32)
    w3 = jnp.pad(params["w3"].astype(jnp.float32),
                 ((0, 0), (0, n_pad - num_outputs)))   # zero-padded cols
    b3 = jnp.pad(params["b3"].reshape(1, num_outputs).astype(jnp.float32),
                 ((0, 0), (0, n_pad - num_outputs)))

    # ---- batch tiling: real footprint model, v7x-safe 2048 cap ----
    in_item = jnp.dtype(dt).itemsize
    out_item = jnp.dtype(out_dt).itemsize
    bytes_per_row = (2 * 2 * S * H * in_item           # 2 inputs x double buffer
                     + 2 * n_pad * out_item            # output double buffer
                     + 4 * hidden * 4 + n_pad * 4)     # f32 temporaries (h1,h2,y)
    budget = 24 * 1024 * 1024                          # headroom under 32 MiB scoped VMEM
    tb = min(2048, budget // max(bytes_per_row, 1))
    if B > 8:
        # >=2 grid steps so the "parallel" batch axis uses both v7x TensorCores.
        tb = min(tb, _round_up((B + 1) // 2, 8))
    tb = min(tb, _round_up(B, 8))
    tb = max(8, (tb // 8) * 8)
    grid = pl.cdiv(B, tb)                              # ragged last block handled by Pallas

    # (B, S, H) -> (B, S*H): contiguous relabel, no HBM copy, no cast, no pad.
    va = V_A.reshape(B, S * H)
    vb = V_B.reshape(B, S * H)

    x_spec = pl.BlockSpec((tb, S * H), lambda i: (i, 0))
    res = lambda a: pl.BlockSpec(a.shape, lambda i: (0, 0))   # VMEM-resident weights

    out = pl.pallas_call(
        aggregate_kernel,
        out_shape=jax.ShapeDtypeStruct((B, n_pad), out_dt),
        grid=(grid,),
        in_specs=[x_spec, x_spec,
                  res(w1a), res(w1b), res(b1),
                  res(w2), res(b2),
                  res(w3), res(b3)],
        out_specs=pl.BlockSpec((tb, n_pad), lambda i: (i, 0)),
        compiler_params=pltpu.CompilerParams(
            dimension_semantics=("parallel",),
            vmem_limit_bytes=32 * 1024 * 1024),
    )(va, vb, w1a, w1b, b1, w2, b2, w3, b3)

    return out[:, :num_outputs]


def init_params(key, hidden_dim, num_outputs):
    """Deterministic synthetic init. num_inputs = 2*hidden_dim (cat of two sums)."""
    num_inputs = 2 * hidden_dim
    k1, k2, k3, k4, k5, k6 = jax.random.split(key, 6)
    scale1 = 1.0 / jnp.sqrt(num_inputs)
    scale2 = 1.0 / jnp.sqrt(hidden_dim)
    return {
        "w1": jax.random.normal(k1, (num_inputs, hidden_dim), jnp.float32) * scale1,
        "b1": jax.random.normal(k2, (1, hidden_dim), jnp.float32) * scale1,
        "w2": jax.random.normal(k3, (hidden_dim, hidden_dim), jnp.float32) * scale2,
        "b2": jax.random.normal(k4, (1, hidden_dim), jnp.float32) * scale2,
        "w3": jax.random.normal(k5, (hidden_dim, num_outputs), jnp.float32) * scale2,
        "b3": jax.random.normal(k6, (1, num_outputs), jnp.float32) * scale2,
    }


def aggregate_reference(V_A, V_B, params):
    sA = V_A.sum(axis=1)
    sB = V_B.sum(axis=1)
    x = jnp.concatenate([sA, sB], axis=1)
    h = jnp.maximum(x @ params["w1"] + params["b1"], 0.0)
    h = jnp.maximum(h @ params["w2"] + params["b2"], 0.0)
    return h @ params["w3"] + params["b3"]


if __name__ == "__main__":
    # TODO(synk): Dropout layers are training-mode stochastic; eval-mode identity assumed.
    batch, seq, hidden_dim, num_outputs = 2, 8, 32, 3

    key = jax.random.PRNGKey(0)
    k_va, k_vb, k_p = jax.random.split(key, 3)
    V_A = jax.random.normal(k_va, (batch, seq, hidden_dim), jnp.float32)
    V_B = jax.random.normal(k_vb, (batch, seq, hidden_dim), jnp.float32)
    params = init_params(k_p, hidden_dim, num_outputs)

    # 1) Exact-precision path: stream f32 directly (no wrapper cast/pad round trip).
    y32 = jax.block_until_ready(aggregate_forward(V_A, V_B, params))
    y_ref = aggregate_reference(V_A, V_B, params)
    assert y32.shape == (batch, num_outputs)
    assert jnp.allclose(y32, y_ref, atol=1e-4, rtol=1e-4)

    # 2) Fast path: bf16 activations produced "upstream" stream straight to the MXU
    #    (bf16 x bf16 -> f32 accumulation, bf16 writeback).
    V_A16 = V_A.astype(jnp.bfloat16)
    V_B16 = V_B.astype(jnp.bfloat16)
    y16 = jax.block_until_ready(aggregate_forward(V_A16, V_B16, params))
    r = lambda a: a.astype(jnp.bfloat16).astype(jnp.float32)
    params16 = dict(params, w1=r(params["w1"]))
    y_ref16 = aggregate_reference(r(V_A16), r(V_B16), params16)
    assert y16.shape == (batch, num_outputs)
    assert jnp.allclose(y16.astype(jnp.float32), y_ref16, atol=3e-2, rtol=3e-2)

    print("KERNEL_OK")
</pallas_src>

<mosaic_0001>
module attributes {stable_mosaic.version = 11 : i64} {
  func.func @aggregate_kernel(%arg0: i32, %arg1: memref<8x256xf32, #tpu.memory_space<vmem>>, %arg2: memref<8x256xf32, #tpu.memory_space<vmem>>, %arg3: memref<256x32xf32, #tpu.memory_space<vmem>>, %arg4: memref<256x32xf32, #tpu.memory_space<vmem>>, %arg5: memref<1x32xf32, #tpu.memory_space<vmem>>, %arg6: memref<32x32xf32, #tpu.memory_space<vmem>>, %arg7: memref<1x32xf32, #tpu.memory_space<vmem>>, %arg8: memref<32x128xf32, #tpu.memory_space<vmem>>, %arg9: memref<1x128xf32, #tpu.memory_space<vmem>>, %arg10: memref<8x128xf32, #tpu.memory_space<vmem>>) attributes {dimension_semantics = [#tpu.dimension_semantics<parallel>], iteration_bounds = array<i64: 1>, scalar_prefetch = 0 : i64, scratch_operands = 0 : i64, tpu.core_type = #tpu.core_type<tc>, window_params = [{transform_indices = @transform_0, window_bounds = array<i64: 8, 256>}, {transform_indices = @transform_1, window_bounds = array<i64: 8, 256>}, {pipeline_mode = #tpu.pipeline_mode<synchronous>, transform_indices = @transform_2, window_bounds = array<i64: 256, 32>}, {pipeline_mode = #tpu.pipeline_mode<synchronous>, transform_indices = @transform_3, window_bounds = array<i64: 256, 32>}, {pipeline_mode = #tpu.pipeline_mode<synchronous>, transform_indices = @transform_4, window_bounds = array<i64: 1, 32>}, {pipeline_mode = #tpu.pipeline_mode<synchronous>, transform_indices = @transform_5, window_bounds = array<i64: 32, 32>}, {pipeline_mode = #tpu.pipeline_mode<synchronous>, transform_indices = @transform_6, window_bounds = array<i64: 1, 32>}, {pipeline_mode = #tpu.pipeline_mode<synchronous>, transform_indices = @transform_7, window_bounds = array<i64: 32, 128>}, {pipeline_mode = #tpu.pipeline_mode<synchronous>, transform_indices = @transform_8, window_bounds = array<i64: 1, 128>}, {transform_indices = @transform_9, window_bounds = array<i64: 8, 128>}]} {
    %c0 = arith.constant 0 : index
    %c0_0 = arith.constant 0 : index
    %0 = vector.load %arg1[%c0, %c0_0] : memref<8x256xf32, #tpu.memory_space<vmem>>, vector<8x256xf32>
    %c0_1 = arith.constant 0 : index
    %c0_2 = arith.constant 0 : index
    %1 = vector.load %arg3[%c0_1, %c0_2] : memref<256x32xf32, #tpu.memory_space<vmem>>, vector<256x32xf32>
    %cst = arith.constant dense<0.000000e+00> : vector<8x32xf32>
    %2 = tpu.matmul %0, %1, %cst {dimension_numbers = #tpu.dot_dimension_numbers<[1], [0], [0], [1], [0, 0, 1, 1], [], []>} : vector<8x256xf32>, vector<256x32xf32>, vector<8x32xf32> -> vector<8x32xf32>
    %c0_3 = arith.constant 0 : index
    %c0_4 = arith.constant 0 : index
    %3 = vector.load %arg2[%c0_3, %c0_4] : memref<8x256xf32, #tpu.memory_space<vmem>>, vector<8x256xf32>
    %c0_5 = arith.constant 0 : index
    %c0_6 = arith.constant 0 : index
    %4 = vector.load %arg4[%c0_5, %c0_6] : memref<256x32xf32, #tpu.memory_space<vmem>>, vector<256x32xf32>
    %cst_7 = arith.constant dense<0.000000e+00> : vector<8x32xf32>
    %5 = tpu.matmul %3, %4, %cst_7 {dimension_numbers = #tpu.dot_dimension_numbers<[1], [0], [0], [1], [0, 0, 1, 1], [], []>} : vector<8x256xf32>, vector<256x32xf32>, vector<8x32xf32> -> vector<8x32xf32>
    %6 = arith.addf %2, %5 : vector<8x32xf32>
    %c0_8 = arith.constant 0 : index
    %c0_9 = arith.constant 0 : index
    %7 = vector.load %arg5[%c0_8, %c0_9] : memref<1x32xf32, #tpu.memory_space<vmem>>, vector<1x32xf32>
    %8 = vector.broadcast %7 : vector<1x32xf32> to vector<8x32xf32>
    %9 = arith.addf %6, %8 : vector<8x32xf32>
    %cst_10 = arith.constant 0.000000e+00 : f32
    %10 = vector.broadcast %cst_10 : f32 to vector<8x32xf32>
    %11 = arith.maximumf %9, %10 : vector<8x32xf32>
    %c0_11 = arith.constant 0 : index
    %c0_12 = arith.constant 0 : index
    %12 = vector.load %arg6[%c0_11, %c0_12] : memref<32x32xf32, #tpu.memory_space<vmem>>, vector<32x32xf32>
    %cst_13 = arith.constant dense<0.000000e+00> : vector<8x32xf32>
    %13 = tpu.matmul %11, %12, %cst_13 {dimension_numbers = #tpu.dot_dimension_numbers<[1], [0], [0], [1], [0, 0, 1, 1], [], []>} : vector<8x32xf32>, vector<32x32xf32>, vector<8x32xf32> -> vector<8x32xf32>
    %c0_14 = arith.constant 0 : index
    %c0_15 = arith.constant 0 : index
    %14 = vector.load %arg7[%c0_14, %c0_15] : memref<1x32xf32, #tpu.memory_space<vmem>>, vector<1x32xf32>
    %15 = vector.broadcast %14 : vector<1x32xf32> to vector<8x32xf32>
    %16 = arith.addf %13, %15 : vector<8x32xf32>
    %cst_16 = arith.constant 0.000000e+00 : f32
    %17 = vector.broadcast %cst_16 : f32 to vector<8x32xf32>
    %18 = arith.maximumf %16, %17 : vector<8x32xf32>
    %c0_17 = arith.constant 0 : index
    %c0_18 = arith.constant 0 : index
    %19 = vector.load %arg8[%c0_17, %c0_18] : memref<32x128xf32, #tpu.memory_space<vmem>>, vector<32x128xf32>
    %cst_19 = arith.constant dense<0.000000e+00> : vector<8x128xf32>
    %20 = tpu.matmul %18, %19, %cst_19 {dimension_numbers = #tpu.dot_dimension_numbers<[1], [0], [0], [1], [0, 0, 1, 1], [], []>} : vector<8x32xf32>, vector<32x128xf32>, vector<8x128xf32> -> vector<8x128xf32>
    %c0_20 = arith.constant 0 : index
    %c0_21 = arith.constant 0 : index
    %21 = vector.load %arg9[%c0_20, %c0_21] : memref<1x128xf32, #tpu.memory_space<vmem>>, vector<1x128xf32>
    %22 = vector.broadcast %21 : vector<1x128xf32> to vector<8x128xf32>
    %23 = arith.addf %20, %22 : vector<8x128xf32>
    %c0_22 = arith.constant 0 : index
    %c0_23 = arith.constant 0 : index
    %24 = vector.load %arg10[%c0_22, %c0_23] : memref<8x128xf32, #tpu.memory_space<vmem>>, vector<8x128xf32>
    tpu.vector_store %arg10[%c0_22, %c0_23], %23 {strides = array<i32>} : memref<8x128xf32, #tpu.memory_space<vmem>>, vector<8x128xf32>,
    return
  }
  func.func @transform_0(%arg0: i32) -> (i32, i32) {
    %c0_i32 = arith.constant 0 : i32
    %c0_i32_0 = arith.constant 0 : i32
    return %arg0, %c0_i32 : i32, i32
  }
  func.func @transform_1(%arg0: i32) -> (i32, i32) {
    %c0_i32 = arith.constant 0 : i32
    %c0_i32_0 = arith.constant 0 : i32
    return %arg0, %c0_i32 : i32, i32
  }
  func.func @transform_2(%arg0: i32) -> (i32, i32) {
    %c0_i32 = arith.constant 0 : i32
    %c0_i32_0 = arith.constant 0 : i32
    %c0_i32_1 = arith.constant 0 : i32
    return %c0_i32, %c0_i32_0 : i32, i32
  }
  func.func @transform_3(%arg0: i32) -> (i32, i32) {
    %c0_i32 = arith.constant 0 : i32
    %c0_i32_0 = arith.constant 0 : i32
    %c0_i32_1 = arith.constant 0 : i32
    return %c0_i32, %c0_i32_0 : i32, i32
  }
  func.func @transform_4(%arg0: i32) -> (i32, i32) {
    %c0_i32 = arith.constant 0 : i32
    %c0_i32_0 = arith.constant 0 : i32
    %c0_i32_1 = arith.constant 0 : i32
    return %c0_i32, %c0_i32_0 : i32, i32
  }
  func.func @transform_5(%arg0: i32) -> (i32, i32) {
    %c0_i32 = arith.constant 0 : i32
    %c0_i32_0 = arith.constant 0 : i32
    %c0_i32_1 = arith.constant 0 : i32
    return %c0_i32, %c0_i32_0 : i32, i32
  }
  func.func @transform_6(%arg0: i32) -> (i32, i32) {
    %c0_i32 = arith.constant 0 : i32
    %c0_i32_0 = arith.constant 0 : i32
    %c0_i32_1 = arith.constant 0 : i32
    return %c0_i32, %c0_i32_0 : i32, i32
  }
  func.func @transform_7(%arg0: i32) -> (i32, i32) {
    %c0_i32 = arith.constant 0 : i32
    %c0_i32_0 = arith.constant 0 : i32
    %c0_i32_1 = arith.constant 0 : i32
    return %c0_i32, %c0_i32_0 : i32, i32
  }
  func.func @transform_8(%arg0: i32) -> (i32, i32) {
    %c0_i32 = arith.constant 0 : i32
    %c0_i32_0 = arith.constant 0 : i32
    %c0_i32_1 = arith.constant 0 : i32
    return %c0_i32, %c0_i32_0 : i32, i32
  }
  func.func @transform_9(%arg0: i32) -> (i32, i32) {
    %c0_i32 = arith.constant 0 : i32
    %c0_i32_0 = arith.constant 0 : i32
    return %arg0, %c0_i32 : i32, i32
  }
}

</mosaic_0001>

<llo_original>
// kernel: tpu_custom_call.1
$region0: #{tpu_custom_call.1}
  #allocation0 [shape = 'u32[]', space=smem, size = 0x4, offset = 0x4, fixed_abs, tag = 'smem constant byte address 0x4 - core index']
  #allocation1 [shape = 'u32[144,128]{1,0:T(1,128)}', space=vmem, size = 0x12000, scoped, tag = 'internal scratch']
  %s0 = inlined_call_operand.vmem [shape: f32[2,256], index: 0, kind: input, shape index: {}]
  %s1 = inlined_call_operand.vmem [shape: f32[2,256], index: 1, kind: input, shape index: {}]
  %s2 = inlined_call_operand.vmem [shape: f32[256,32], index: 2, kind: input, shape index: {}]
  %s3 = inlined_call_operand.vmem [shape: f32[256,32], index: 3, kind: input, shape index: {}]
  %s4 = inlined_call_operand.vmem [shape: f32[1,32], index: 4, kind: input, shape index: {}]
  %s5 = inlined_call_operand.vmem [shape: f32[32,32], index: 5, kind: input, shape index: {}]
  %s6 = inlined_call_operand.vmem [shape: f32[1,32], index: 6, kind: input, shape index: {}]
  %s7 = inlined_call_operand.vmem [shape: f32[32,128], index: 7, kind: input, shape index: {}]
  %s8 = inlined_call_operand.vmem [shape: f32[1,128], index: 8, kind: input, shape index: {}]
  %s9 = inlined_call_operand.hbm [shape: f32[2,128], index: 9, kind: output, shape index: {}]
  %s10 = sld [smem:[#allocation0]]
  $region46: #{tpu_custom_call.1} parent=0
    _
  %s12 = ssub.s32 1, %s10
  %s13 = scalar_select 0, %s12, %s10
  $region1: #{tpu_custom_call.1} parent=0
    #allocation2 [shape = 'u8[4096]{0}', space=vmem, size = 0x1000, scoped, tag = 'output window, operand 0, single buffered']
    #allocation3 [shape = 's32[1]{0}', space=sflag, size = 0x4, scoped, tag = 'scoped memory for tpu_custom_call.1']
    %14 = vsyncpa [#allocation3], 0
    // Predicated region
    $region2: #{tpu_custom_call.1} parent=1 // pred_check
      _
    $region3: #{tpu_custom_call.1} parent=1 // pred_check_branch
      %16 = sbr.rel (0) target = $region5
    $region4: #{tpu_custom_call.1} parent=1 // pred_region
      _
    $region5: #{tpu_custom_call.1} parent=1 // pred_fallthru
      _
    // Predicated region
    $region6: #{tpu_custom_call.1} parent=1 // pred_check
      _
    $region7: #{tpu_custom_call.1} parent=1 // pred_check_branch
      %18 = sbr.rel (0) target = $region9
    $region8: #{tpu_custom_call.1} parent=1 // pred_region
      _
    $region9: #{tpu_custom_call.1} parent=1 // pred_fallthru
      _
    // Predicated region
    $region10: #{tpu_custom_call.1} parent=1 // pred_check
      _
    $region11: #{tpu_custom_call.1} parent=1 // pred_check_branch
      %20 = sbr.rel (0) target = $region13
    $region12: #{tpu_custom_call.1} parent=1 // pred_region
      _
    $region13: #{tpu_custom_call.1} parent=1 // pred_fallthru
      _
    // Predicated region
    $region14: #{tpu_custom_call.1} parent=1 // pred_check
      _
    $region15: #{tpu_custom_call.1} parent=1 // pred_check_branch
      %22 = sbr.rel (0) target = $region17
    $region16: #{tpu_custom_call.1} parent=1 // pred_region
      _
    $region17: #{tpu_custom_call.1} parent=1 // pred_fallthru
      _
    // Predicated region
    $region18: #{tpu_custom_call.1} parent=1 // pred_check
      _
    $region19: #{tpu_custom_call.1} parent=1 // pred_check_branch
      %24 = sbr.rel (0) target = $region21
    $region20: #{tpu_custom_call.1} parent=1 // pred_region
      _
    $region21: #{tpu_custom_call.1} parent=1 // pred_fallthru
      _
    // Predicated region
    $region22: #{tpu_custom_call.1} parent=1 // pred_check
      _
    $region23: #{tpu_custom_call.1} parent=1 // pred_check_branch
      %26 = sbr.rel (0) target = $region25
    $region24: #{tpu_custom_call.1} parent=1 // pred_region
      _
    $region25: #{tpu_custom_call.1} parent=1 // pred_fallthru
      _
    // Predicated region
    $region26: #{tpu_custom_call.1} parent=1 // pred_check
      _
    $region27: #{tpu_custom_call.1} parent=1 // pred_check_branch
      %28 = sbr.rel (0) target = $region29
    $region28: #{tpu_custom_call.1} parent=1 // pred_region
      _
    $region29: #{tpu_custom_call.1} parent=1 // pred_fallthru
      _
    // Predicated region
    $region30: #{tpu_custom_call.1} parent=1 // pred_check
      _
    $region31: #{tpu_custom_call.1} parent=1 // pred_check_branch
      %30 = sbr.rel (0) target = $region33
    $region32: #{tpu_custom_call.1} parent=1 // pred_region
      _
    $region33: #{tpu_custom_call.1} parent=1 // pred_fallthru
      _
    // Predicated region
    $region34: #{tpu_custom_call.1} parent=1 // pred_check
      _
    $region35: #{tpu_custom_call.1} parent=1 // pred_check_branch
      %32 = sbr.rel (0) target = $region37
    $region36: #{tpu_custom_call.1} parent=1 // pred_region
      _
    $region37: #{tpu_custom_call.1} parent=1 // pred_fallthru
      _
    %v33 = vld [vmem:[%s0] sm:$0xf]
    %v34 = vld [vmem:[%s0 + $0x4] sm:$0xf]
    %v35 = vld [vmem:[%s0 + $0x8] sm:$0xf]
    %v36 = vld [vmem:[%s0 + $0xc] sm:$0xf]
    %v37 = vld [vmem:[%s2] sm:$0xff]
    %v38 = vld [vmem:[%s2 + $0x8] sm:$0xff]
    %v39 = vld [vmem:[%s2 + $0x10] sm:$0xff]
    %v40 = vld [vmem:[%s2 + $0x18] sm:$0xff]
    %v41 = vld [vmem:[%s2 + $0x20] sm:$0xff]
    %v42 = vld [vmem:[%s2 + $0x28] sm:$0xff]
    %v43 = vld [vmem:[%s2 + $0x30] sm:$0xff]
    %v44 = vld [vmem:[%s2 + $0x38] sm:$0xff]
    %v45 = vld [vmem:[%s2 + $0x40] sm:$0xff]
    %v46 = vld [vmem:[%s2 + $0x48] sm:$0xff]
    %v47 = vld [vmem:[%s2 + $0x50] sm:$0xff]
    %v48 = vld [vmem:[%s2 + $0x58] sm:$0xff]
    %v49 = vld [vmem:[%s2 + $0x60] sm:$0xff]
    %v50 = vld [vmem:[%s2 + $0x68] sm:$0xff]
    %v51 = vld [vmem:[%s2 + $0x70] sm:$0xff]
    %v52 = vld [vmem:[%s2 + $0x78] sm:$0xff]
    %v53 = vld [vmem:[%s2 + $0x80] sm:$0xff]
    %v54 = vld [vmem:[%s2 + $0x88] sm:$0xff]
    %v55 = vld [vmem:[%s2 + $0x90] sm:$0xff]
    %v56 = vld [vmem:[%s2 + $0x98] sm:$0xff]
    %v57 = vld [vmem:[%s2 + $0xa0] sm:$0xff]
    %v58 = vld [vmem:[%s2 + $0xa8] sm:$0xff]
    %v59 = vld [vmem:[%s2 + $0xb0] sm:$0xff]
    %v60 = vld [vmem:[%s2 + $0xb8] sm:$0xff]
    %v61 = vld [vmem:[%s2 + $0xc0] sm:$0xff]
    %v62 = vld [vmem:[%s2 + $0xc8] sm:$0xff]
    %v63 = vld [vmem:[%s2 + $0xd0] sm:$0xff]
    %v64 = vld [vmem:[%s2 + $0xd8] sm:$0xff]
    %v65 = vld [vmem:[%s2 + $0xe0] sm:$0xff]
    %v66 = vld [vmem:[%s2 + $0xe8] sm:$0xff]
    %v67 = vld [vmem:[%s2 + $0xf0] sm:$0xff]
    %v68 = vld [vmem:[%s2 + $0xf8] sm:$0xff]
    %v69 = vld [vmem:[%s1] sm:$0xf]
    %v70 = vld [vmem:[%s1 + $0x4] sm:$0xf]
    %v71 = vld [vmem:[%s1 + $0x8] sm:$0xf]
    %v72 = vld [vmem:[%s1 + $0xc] sm:$0xf]
    %v73 = vld [vmem:[%s3] sm:$0xff]
    %v74 = vld [vmem:[%s3 + $0x8] sm:$0xff]
    %v75 = vld [vmem:[%s3 + $0x10] sm:$0xff]
    %v76 = vld [vmem:[%s3 + $0x18] sm:$0xff]
    %v77 = vld [vmem:[%s3 + $0x20] sm:$0xff]
    %v78 = vld [vmem:[%s3 + $0x28] sm:$0xff]
    %v79 = vld [vmem:[%s3 + $0x30] sm:$0xff]
    %v80 = vld [vmem:[%s3 + $0x38] sm:$0xff]
    %v81 = vld [vmem:[%s3 + $0x40] sm:$0xff]
    %v82 = vld [vmem:[%s3 + $0x48] sm:$0xff]
    %v83 = vld [vmem:[%s3 + $0x50] sm:$0xff]
    %v84 = vld [vmem:[%s3 + $0x58] sm:$0xff]
    %v85 = vld [vmem:[%s3 + $0x60] sm:$0xff]
    %v86 = vld [vmem:[%s3 + $0x68] sm:$0xff]
    %v87 = vld [vmem:[%s3 + $0x70] sm:$0xff]
    %v88 = vld [vmem:[%s3 + $0x78] sm:$0xff]
    %v89 = vld [vmem:[%s3 + $0x80] sm:$0xff]
    %v90 = vld [vmem:[%s3 + $0x88] sm:$0xff]
    %v91 = vld [vmem:[%s3 + $0x90] sm:$0xff]
    %v92 = vld [vmem:[%s3 + $0x98] sm:$0xff]
    %v93 = vld [vmem:[%s3 + $0xa0] sm:$0xff]
    %v94 = vld [vmem:[%s3 + $0xa8] sm:$0xff]
    %v95 = vld [vmem:[%s3 + $0xb0] sm:$0xff]
    %v96 = vld [vmem:[%s3 + $0xb8] sm:$0xff]
    %v97 = vld [vmem:[%s3 + $0xc0] sm:$0xff]
    %v98 = vld [vmem:[%s3 + $0xc8] sm:$0xff]
    %v99 = vld [vmem:[%s3 + $0xd0] sm:$0xff]
    %v100 = vld [vmem:[%s3 + $0xd8] sm:$0xff]
    %v101 = vld [vmem:[%s3 + $0xe0] sm:$0xff]
    %v102 = vld [vmem:[%s3 + $0xe8] sm:$0xff]
    %v103 = vld [vmem:[%s3 + $0xf0] sm:$0xff]
    %v104 = vld [vmem:[%s3 + $0xf8] sm:$0xff]
    %v109 = vcombine.low %v69, %v70
    %v110 = vcombine.low %v71, %v72
    %v112 = vunpack.c.l.s4 1983009808
    %v113 = vunpack.c.0.s8 %v112
    %v114 = vlaneseq
    %v115 = vshrl.u32 %v114, 7
    %v116 = vsub.s32 %v113, %v115
    %v117 = vrot.slane %v109, %v116
    %v119 = vunpack.c.l.s4 1983009808
    %v120 = vunpack.c.0.s8 %v119
    %v121 = vlaneseq
    %v122 = vshrl.u32 %v121, 7
    %v123 = vsub.s32 %v120, %v122
    %v124 = vrot.slane %v110, %v123
    %v125 = vcombine.low %v117, %v124
    %v126 = vcombine.high %v117, %v124
    %129 = vmatprep.subr.mxu0 0.0
    %130 = vmatpush1.msra.mxu0 %v73
    %131 = vmatprep.subr.mxu0 0.0
    %132 = vmatpush1.msra.mxu0 %v74
    %133 = vmatprep.subr.mxu0 0.0
    %134 = vmatpush1.msra.mxu0 %v75
    %135 = vmatprep.subr.mxu0 0.0
    %136 = vmatpush1.msra.mxu0 %v76
    %137 = vmatprep.subr.mxu0 0.0
    %138 = vmatpush1.msra.mxu0 %v77
    %139 = vmatprep.subr.mxu0 0.0
    %140 = vmatpush1.msra.mxu0 %v78
    %141 = vmatprep.subr.mxu0 0.0
    %142 = vmatpush1.msra.mxu0 %v79
    %143 = vmatprep.subr.mxu0 0.0
    %144 = vmatpush1.msra.mxu0 %v80
    %145 = vmatprep.subr.mxu0 0.0
    %146 = vmatpush1.msra.mxu0 %v81
    %147 = vmatprep.subr.mxu0 0.0
    %148 = vmatpush1.msra.mxu0 %v82
    %149 = vmatprep.subr.mxu0 0.0
    %150 = vmatpush1.msra.mxu0 %v83
    %151 = vmatprep.subr.mxu0 0.0
    %152 = vmatpush1.msra.mxu0 %v84
    %153 = vmatprep.subr.mxu0 0.0
    %154 = vmatpush1.msra.mxu0 %v85
    %155 = vmatprep.subr.mxu0 0.0
    %156 = vmatpush1.msra.mxu0 %v86
    %157 = vmatprep.subr.mxu0 0.0
    %158 = vmatpush1.msra.mxu0 %v87
    %159 = vmatprep.subr.mxu0 0.0
    %160 = vmatpush1.msra.mxu0 %v88
    %161 = vmatprep.subr.mxu0 0.0
    %162 = vmatpush1.msra.mxu0 %v89
    %163 = vmatprep.subr.mxu0 0.0
    %164 = vmatpush1.msra.mxu0 %v90
    %165 = vmatprep.subr.mxu0 0.0
    %166 = vmatpush1.msra.mxu0 %v91
    %167 = vmatprep.subr.mxu0 0.0
    %168 = vmatpush1.msra.mxu0 %v92
    %169 = vmatprep.subr.mxu0 0.0
    %170 = vmatpush1.msra.mxu0 %v93
    %171 = vmatprep.subr.mxu0 0.0
    %172 = vmatpush1.msra.mxu0 %v94
    %173 = vmatprep.subr.mxu0 0.0
    %174 = vmatpush1.msra.mxu0 %v95
    %175 = vmatprep.subr.mxu0 0.0
    %176 = vmatpush1.msra.mxu0 %v96
    %177 = vmatprep.subr.mxu0 0.0
    %178 = vmatpush1.msra.mxu0 %v97
    %179 = vmatprep.subr.mxu0 0.0
    %180 = vmatpush1.msra.mxu0 %v98
    %181 = vmatprep.subr.mxu0 0.0
    %182 = vmatpush1.msra.mxu0 %v99
    %183 = vmatprep.subr.mxu0 0.0
    %184 = vmatpush1.msra.mxu0 %v100
    %185 = vmatprep.subr.mxu0 0.0
    %186 = vmatpush1.msra.mxu0 %v101
    %187 = vmatprep.subr.mxu0 0.0
    %188 = vmatpush1.msra.mxu0 %v102
    %189 = vmatprep.subr.mxu0 0.0
    %190 = vmatpush1.msra.mxu0 %v103
    %191 = vmatprep.subr.mxu0 0.0
    %192 = vmatpush1.msra.mxu0 %v104
    %193 = vmatprep.mubr.f32.mxu0 %v126
    %194 = vmatmul.mubr.f32.gmra.mrb[0].mxu0 %v125
    %v195 = vpop.f32.mrb[0].mxu0
    %v196 = vadd.f32 0.0, %v195
    %v197 = vpop.f32.mrb[0].mxu0
    %198 = vdwg.mxu0
    %v203 = vcombine.low %v33, %v34
    %v204 = vcombine.low %v35, %v36
    %v206 = vunpack.c.l.s4 1983009808
    %v207 = vunpack.c.0.s8 %v206
    %v208 = vlaneseq
    %v209 = vshrl.u32 %v208, 7
    %v210 = vsub.s32 %v207, %v209
    %v211 = vrot.slane %v203, %v210
    %v213 = vunpack.c.l.s4 1983009808
    %v214 = vunpack.c.0.s8 %v213
    %v215 = vlaneseq
    %v216 = vshrl.u32 %v215, 7
    %v217 = vsub.s32 %v214, %v216
    %v218 = vrot.slane %v204, %v217
    %v219 = vcombine.low %v211, %v218
    %v220 = vcombine.high %v211, %v218
    %223 = vmatprep.subr.mxu0 0.0
    %224 = vmatpush1.msra.mxu0 %v37
    %225 = vmatprep.subr.mxu0 0.0
    %226 = vmatpush1.msra.mxu0 %v38
    %227 = vmatprep.subr.mxu0 0.0
    %228 = vmatpush1.msra.mxu0 %v39
    %229 = vmatprep.subr.mxu0 0.0
    %230 = vmatpush1.msra.mxu0 %v40
    %231 = vmatprep.subr.mxu0 0.0
    %232 = vmatpush1.msra.mxu0 %v41
    %233 = vmatprep.subr.mxu0 0.0
    %234 = vmatpush1.msra.mxu0 %v42
    %235 = vmatprep.subr.mxu0 0.0
    %236 = vmatpush1.msra.mxu0 %v43
    %237 = vmatprep.subr.mxu0 0.0
    %238 = vmatpush1.msra.mxu0 %v44
    %239 = vmatprep.subr.mxu0 0.0
    %240 = vmatpush1.msra.mxu0 %v45
    %241 = vmatprep.subr.mxu0 0.0
    %242 = vmatpush1.msra.mxu0 %v46
    %243 = vmatprep.subr.mxu0 0.0
    %244 = vmatpush1.msra.mxu0 %v47
    %245 = vmatprep.subr.mxu0 0.0
    %246 = vmatpush1.msra.mxu0 %v48
    %247 = vmatprep.subr.mxu0 0.0
    %248 = vmatpush1.msra.mxu0 %v49
    %249 = vmatprep.subr.mxu0 0.0
    %250 = vmatpush1.msra.mxu0 %v50
    %251 = vmatprep.subr.mxu0 0.0
    %252 = vmatpush1.msra.mxu0 %v51
    %253 = vmatprep.subr.mxu0 0.0
    %254 = vmatpush1.msra.mxu0 %v52
    %255 = vmatprep.subr.mxu0 0.0
    %256 = vmatpush1.msra.mxu0 %v53
    %257 = vmatprep.subr.mxu0 0.0
    %258 = vmatpush1.msra.mxu0 %v54
    %259 = vmatprep.subr.mxu0 0.0
    %260 = vmatpush1.msra.mxu0 %v55
    %261 = vmatprep.subr.mxu0 0.0
    %262 = vmatpush1.msra.mxu0 %v56
    %263 = vmatprep.subr.mxu0 0.0
    %264 = vmatpush1.msra.mxu0 %v57
    %265 = vmatprep.subr.mxu0 0.0
    %266 = vmatpush1.msra.mxu0 %v58
    %267 = vmatprep.subr.mxu0 0.0
    %268 = vmatpush1.msra.mxu0 %v59
    %269 = vmatprep.subr.mxu0 0.0
    %270 = vmatpush1.msra.mxu0 %v60
    %271 = vmatprep.subr.mxu0 0.0
    %272 = vmatpush1.msra.mxu0 %v61
    %273 = vmatprep.subr.mxu0 0.0
    %274 = vmatpush1.msra.mxu0 %v62
    %275 = vmatprep.subr.mxu0 0.0
    %276 = vmatpush1.msra.mxu0 %v63
    %277 = vmatprep.subr.mxu0 0.0
    %278 = vmatpush1.msra.mxu0 %v64
    %279 = vmatprep.subr.mxu0 0.0
    %280 = vmatpush1.msra.mxu0 %v65
    %281 = vmatprep.subr.mxu0 0.0
    %282 = vmatpush1.msra.mxu0 %v66
    %283 = vmatprep.subr.mxu0 0.0
    %284 = vmatpush1.msra.mxu0 %v67
    %285 = vmatprep.subr.mxu0 0.0
    %286 = vmatpush1.msra.mxu0 %v68
    %287 = vmatprep.mubr.f32.mxu0 %v220
    %288 = vmatmul.mubr.f32.gmra.mrb[0].mxu0 %v219
    %v289 = vpop.f32.mrb[0].mxu0
    %v290 = vadd.f32 %v196, %v289
    %v291 = vpop.f32.mrb[0].mxu0
    %292 = vdwg.mxu0
    %v293 = vld [vmem:[%s4] sm:$0x1]
    %v295 = vlaneseq
    %v296 = vshrl.u32 %v295, 7
    %v297 = vsub.s32 0, %v296
    %v298 = vrot.slane %v293, %v297
    %v300 = vadd.f32 %v290, %v298
    %v301 = vmax.f32 %v300, 0.0
    %v302 = vld [vmem:[%s5] sm:$0xff]
    %v303 = vld [vmem:[%s5 + $0x8] sm:$0xff]
    %v304 = vld [vmem:[%s5 + $0x10] sm:$0xff]
    %v305 = vld [vmem:[%s5 + $0x18] sm:$0xff]
    %v306 = vld [vmem:[%s6] sm:$0x1]
    %v308 = vlaneseq
    %v309 = vshrl.u32 %v308, 7
    %v310 = vsub.s32 0, %v309
    %v311 = vrot.slane %v306, %v310
    %vm313 = vcmask 261120
    %v315 = vsel %vm313, %v301, 0
    %317 = vmatprep.subr.mxu0 0.0
    %318 = vmatpush1.msra.mxu0 %v302
    %319 = vmatprep.subr.mxu0 0.0
    %320 = vmatpush1.msra.mxu0 %v303
    %321 = vmatprep.subr.mxu0 0.0
    %322 = vmatpush1.msra.mxu0 %v304
    %323 = vmatprep.subr.mxu0 0.0
    %324 = vmatpush1.msra.mxu0 %v305
    %325 = vmatprep.subr.mxu0 0.0
    %326 = vmatpush1.msra.mxu0 0.0
    %327 = vmatprep.subr.mxu0 0.0
    %328 = vmatpush1.msra.mxu0 0.0
    %329 = vmatprep.subr.mxu0 0.0
    %330 = vmatpush1.msra.mxu0 0.0
    %331 = vmatprep.subr.mxu0 0.0
    %332 = vmatpush1.msra.mxu0 0.0
    %333 = vmatprep.subr.mxu0 0.0
    %334 = vmatpush1.msra.mxu0 0.0
    %335 = vmatprep.subr.mxu0 0.0
    %336 = vmatpush1.msra.mxu0 0.0
    %337 = vmatprep.subr.mxu0 0.0
    %338 = vmatpush1.msra.mxu0 0.0
    %339 = vmatprep.subr.mxu0 0.0
    %340 = vmatpush1.msra.mxu0 0.0
    %341 = vmatprep.subr.mxu0 0.0
    %342 = vmatpush1.msra.mxu0 0.0
    %343 = vmatprep.subr.mxu0 0.0
    %344 = vmatpush1.msra.mxu0 0.0
    %345 = vmatprep.subr.mxu0 0.0
    %346 = vmatpush1.msra.mxu0 0.0
    %347 = vmatprep.subr.mxu0 0.0
    %348 = vmatpush1.msra.mxu0 0.0
    %349 = vmatprep.subr.mxu0 0.0
    %350 = vmatpush1.msra.mxu0 0.0
    %351 = vmatprep.subr.mxu0 0.0
    %352 = vmatpush1.msra.mxu0 0.0
    %353 = vmatprep.subr.mxu0 0.0
    %354 = vmatpush1.msra.mxu0 0.0
    %355 = vmatprep.subr.mxu0 0.0
    %356 = vmatpush1.msra.mxu0 0.0
    %357 = vmatprep.subr.mxu0 0.0
    %358 = vmatpush1.msra.mxu0 0.0
    %359 = vmatprep.subr.mxu0 0.0
    %360 = vmatpush1.msra.mxu0 0.0
    %361 = vmatprep.subr.mxu0 0.0
    %362 = vmatpush1.msra.mxu0 0.0
    %363 = vmatprep.subr.mxu0 0.0
    %364 = vmatpush1.msra.mxu0 0.0
    %365 = vmatprep.subr.mxu0 0.0
    %366 = vmatpush1.msra.mxu0 0.0
    %367 = vmatprep.subr.mxu0 0.0
    %368 = vmatpush1.msra.mxu0 0.0
    %369 = vmatprep.subr.mxu0 0.0
    %370 = vmatpush1.msra.mxu0 0.0
    %371 = vmatprep.subr.mxu0 0.0
    %372 = vmatpush1.msra.mxu0 0.0
    %373 = vmatprep.subr.mxu0 0.0
    %374 = vmatpush1.msra.mxu0 0.0
    %375 = vmatprep.subr.mxu0 0.0
    %376 = vmatpush1.msra.mxu0 0.0
    %377 = vmatprep.subr.mxu0 0.0
    %378 = vmatpush1.msra.mxu0 0.0
    %379 = vmatprep.subr.mxu0 0.0
    %380 = vmatpush1.msra.mxu0 0.0
    %381 = vmatprep.mubr.f32.mxu0 0.0
    %382 = vmatmul.mubr.f32.gmra.mrb[0].mxu0 %v315
    %v383 = vpop.f32.mrb[0].mxu0
    %v384 = vadd.f32 %v311, %v383
    %v385 = vpop.f32.mrb[0].mxu0
    %386 = vdwg.mxu0
    %v387 = vmax.f32 %v384, 0.0
    %v388 = vld [vmem:[%s7] sm:$0xff]
    %v389 = vld [vmem:[%s7 + $0x8] sm:$0xff]
    %v390 = vld [vmem:[%s7 + $0x10] sm:$0xff]
    %v391 = vld [vmem:[%s7 + $0x18] sm:$0xff]
    %v392 = vld [vmem:[%s8] sm:$0x1]
    %v394 = vlaneseq
    %v395 = vshrl.u32 %v394, 7
    %v396 = vsub.s32 0, %v395
    %v397 = vrot.slane %v392, %v396
    %v400 = vsel %vm313, %v387, 0
    %402 = vmatprep.subr.mxu0 0.0
    %403 = vmatpush1.msra.mxu0 %v388
    %404 = vmatprep.subr.mxu0 0.0
    %405 = vmatpush1.msra.mxu0 %v389
    %406 = vmatprep.subr.mxu0 0.0
    %407 = vmatpush1.msra.mxu0 %v390
    %408 = vmatprep.subr.mxu0 0.0
    %409 = vmatpush1.msra.mxu0 %v391
    %410 = vmatprep.subr.mxu0 0.0
    %411 = vmatpush1.msra.mxu0 0.0
    %412 = vmatprep.subr.mxu0 0.0
    %413 = vmatpush1.msra.mxu0 0.0
    %414 = vmatprep.subr.mxu0 0.0
    %415 = vmatpush1.msra.mxu0 0.0
    %416 = vmatprep.subr.mxu0 0.0
    %417 = vmatpush1.msra.mxu0 0.0
    %418 = vmatprep.subr.mxu0 0.0
    %419 = vmatpush1.msra.mxu0 0.0
    %420 = vmatprep.subr.mxu0 0.0
    %421 = vmatpush1.msra.mxu0 0.0
    %422 = vmatprep.subr.mxu0 0.0
    %423 = vmatpush1.msra.mxu0 0.0
    %424 = vmatprep.subr.mxu0 0.0
    %425 = vmatpush1.msra.mxu0 0.0
    %426 = vmatprep.subr.mxu0 0.0
    %427 = vmatpush1.msra.mxu0 0.0
    %428 = vmatprep.subr.mxu0 0.0
    %429 = vmatpush1.msra.mxu0 0.0
    %430 = vmatprep.subr.mxu0 0.0
    %431 = vmatpush1.msra.mxu0 0.0
    %432 = vmatprep.subr.mxu0 0.0
    %433 = vmatpush1.msra.mxu0 0.0
    %434 = vmatprep.subr.mxu0 0.0
    %435 = vmatpush1.msra.mxu0 0.0
    %436 = vmatprep.subr.mxu0 0.0
    %437 = vmatpush1.msra.mxu0 0.0
    %438 = vmatprep.subr.mxu0 0.0
    %439 = vmatpush1.msra.mxu0 0.0
    %440 = vmatprep.subr.mxu0 0.0
    %441 = vmatpush1.msra.mxu0 0.0
    %442 = vmatprep.subr.mxu0 0.0
    %443 = vmatpush1.msra.mxu0 0.0
    %444 = vmatprep.subr.mxu0 0.0
    %445 = vmatpush1.msra.mxu0 0.0
    %446 = vmatprep.subr.mxu0 0.0
    %447 = vmatpush1.msra.mxu0 0.0
    %448 = vmatprep.subr.mxu0 0.0
    %449 = vmatpush1.msra.mxu0 0.0
    %450 = vmatprep.subr.mxu0 0.0
    %451 = vmatpush1.msra.mxu0 0.0
    %452 = vmatprep.subr.mxu0 0.0
    %453 = vmatpush1.msra.mxu0 0.0
    %454 = vmatprep.subr.mxu0 0.0
    %455 = vmatpush1.msra.mxu0 0.0
    %456 = vmatprep.subr.mxu0 0.0
    %457 = vmatpush1.msra.mxu0 0.0
    %458 = vmatprep.subr.mxu0 0.0
    %459 = vmatpush1.msra.mxu0 0.0
    %460 = vmatprep.subr.mxu0 0.0
    %461 = vmatpush1.msra.mxu0 0.0
    %462 = vmatprep.subr.mxu0 0.0
    %463 = vmatpush1.msra.mxu0 0.0
    %464 = vmatprep.subr.mxu0 0.0
    %465 = vmatpush1.msra.mxu0 0.0
    %466 = vmatprep.mubr.f32.mxu0 0.0
    %467 = vmatmul.mubr.f32.gmra.mrb[0].mxu0 %v400
    %v468 = vpop.f32.mrb[0].mxu0
    %v469 = vadd.f32 %v397, %v468
    %v470 = vpop.f32.mrb[0].mxu0
    %471 = vdwg.mxu0
    %472 = vst [vmem:[#allocation2] sm:$0xff] %v469
    // Predicated region
    $region38: #{tpu_custom_call.1} parent=1 // pred_check
      _
    $region39: #{tpu_custom_call.1} parent=1 // pred_check_branch
      %474 = sbr.rel (0) target = $region41
    $region40: #{tpu_custom_call.1} parent=1 // pred_region
      %s476 = ssub.s32 128, 32
      %477 = vsyncadd [#allocation3], %s476
      %s478 = sshll.u32 [#allocation2], 4
      %s479 = int_to_ptr.vmem [resolvable:$true] %s478
      %484 = dma.vmem_to_hbm [thread:$0]  %s479, 32, %s9, [#allocation3], 32, 32, 2
    $region41: #{tpu_custom_call.1} parent=1 // pred_fallthru
      _
    // Predicated region
    $region42: #{tpu_custom_call.1} parent=1 // pred_check
      _
    $region43: #{tpu_custom_call.1} parent=1 // pred_check_branch
      %486 = sbr.rel (0) target = $region45
    $region44: #{tpu_custom_call.1} parent=1 // pred_region
      %487 = dma.done [#allocation3], 128
    $region45: #{tpu_custom_call.1} parent=1 // pred_fallthru
      _
    %488 = vsyncpa [#allocation3], 1

</llo_original>
